<compile_context>
chip_gen: v6e
topology: v6e:2x2x1
jax: 0.10.0
libtpu: 0.0.40
codegen_flags: <defaults>
</compile_context>

<pallas_src>
import jax
import jax.numpy as jnp
import numpy as np
from jax import lax
from jax.experimental import pallas as pl
from jax.experimental.pallas import tpu as pltpu

LANE = 128


def _round_up(n: int, m: int) -> int:
    return ((n + m - 1) // m) * m


def _make_encoder_kernel(num_layers: int):
    """Kernel ref order: x_tile, w_0, b_0, w_1, b_1, ..., out_tile."""

    def kernel(*refs):
        x_ref = refs[0]
        o_ref = refs[-1]
        h = x_ref[...]                                   # (TB, D0) matmul dtype (bf16)
        for i in range(num_layers):
            w_ref = refs[1 + 2 * i]                      # (Di, Di+1) matmul dtype
            b_ref = refs[2 + 2 * i]                      # (1,  Di+1) f32
            if i > 0:
                # ReLU on the f32 accumulator, then drop to the MXU input dtype.
                h = jnp.maximum(h, 0.0).astype(w_ref.dtype)
            # MXU matmul with f32 accumulation; bias add stays in f32.
            h = jnp.dot(h, w_ref[...], preferred_element_type=jnp.float32) + b_ref[...]
        # x / x.pow(2).sum(1, keepdim=True).sqrt()  (no eps, matching PyTorch exactly).
        # Padded feature lanes are exactly 0, so they do not perturb the sum.
        sumsq = jnp.sum(h * h, axis=-1, keepdims=True)   # XLU cross-lane reduce
        inv = lax.rsqrt(sumsq)                           # EUP rsqrt, not a VALU divide
        o_ref[...] = (h * inv).astype(o_ref.dtype)

    return kernel


def linear_encoder_forward(x, weights, biases, *, tile_b: int = 128,
                           matmul_dtype=jnp.bfloat16):
    """x: (B, input_size); weights[i]: (in_i, out_i); biases[i]: (out_i,)."""
    num_layers = len(weights)
    B, d_in = x.shape
    out_dim = weights[-1].shape[1]

    # Pad every feature dim up to a multiple of 128 lanes (lane-dense loads/stores,
    # full MXU N/K). Padding with zeros is exact (see kernel comment).
    dims = [d_in] + [w.shape[1] for w in weights]
    pdims = [_round_up(d, LANE) for d in dims]

    # Batch tile: multiple of 8 sublanes, capped at tile_b (default 128); pad batch
    # so the grid divides evenly. Keep tile small enough for v7x's 64 MiB VMEM.
    tb = min(tile_b, _round_up(B, 8))
    b_pad = _round_up(B, tb)

    # One-time wrapper-side casts + zero padding (hoisted out of the kernel loop).
    xp = jnp.zeros((b_pad, pdims[0]), matmul_dtype).at[:B, :d_in].set(
        x.astype(matmul_dtype))
    operands = [xp]
    in_specs = [pl.BlockSpec((tb, pdims[0]), lambda i: (i, 0))]
    for li, (w, b) in enumerate(zip(weights, biases)):
        wp = jnp.zeros((pdims[li], pdims[li + 1]), matmul_dtype)
        wp = wp.at[: w.shape[0], : w.shape[1]].set(w.astype(matmul_dtype))
        bp = jnp.zeros((1, pdims[li + 1]), jnp.float32)
        bp = bp.at[0, : b.shape[0]].set(b.astype(jnp.float32))
        operands += [wp, bp]
        # Weights/biases: whole-array blocks, same block every grid step -> resident.
        in_specs += [pl.BlockSpec(wp.shape, lambda i: (0, 0)),
                     pl.BlockSpec(bp.shape, lambda i: (0, 0))]

    out_pad = pdims[-1]
    out = pl.pallas_call(
        _make_encoder_kernel(num_layers),
        out_shape=jax.ShapeDtypeStruct((b_pad, out_pad), jnp.float32),
        grid=(b_pad // tb,),
        in_specs=in_specs,
        out_specs=pl.BlockSpec((tb, out_pad), lambda i: (i, 0)),
        compiler_params=pltpu.CompilerParams(
            dimension_semantics=("parallel",)),   # shard batch tiles across TCs (v7x)
    )(*operands)

    # Strip batch/feature padding.
    return out[:B, :out_dim]


# ----------------------------- init & references -----------------------------

def _kaiming_uniform(key, fan_in, fan_out):
    # kaiming_uniform_(mode='fan_in', nonlinearity='relu'): bound = sqrt(6 / fan_in)
    bound = np.sqrt(6.0 / fan_in)
    # PyTorch stores weight as (out, in); we store transposed (in, out) for x @ W.
    return jax.random.uniform(key, (fan_in, fan_out), jnp.float32, -bound, bound)


def _bias_init(key, fan_in, fan_out):
    bound = 1.0 / np.sqrt(fan_in)
    return jax.random.uniform(key, (fan_out,), jnp.float32, -bound, bound)


def _reference_forward_f32(x, weights, biases):
    h = x
    for i, (w, b) in enumerate(zip(weights, biases)):
        if i > 0:
            h = jnp.maximum(h, 0.0)
        h = h @ w + b
    return h / jnp.sqrt(jnp.sum(h * h, axis=1, keepdims=True))


def _reference_forward_matched(x, weights, biases, matmul_dtype=jnp.bfloat16):
    # Same bf16-in / f32-accumulate numerics as the kernel, for a tight check.
    h = x.astype(matmul_dtype)
    for i, (w, b) in enumerate(zip(weights, biases)):
        if i > 0:
            h = jnp.maximum(h, 0.0).astype(matmul_dtype)
        h = jnp.dot(h, w.astype(matmul_dtype),
                    preferred_element_type=jnp.float32) + b
    return h * lax.rsqrt(jnp.sum(h * h, axis=1, keepdims=True))


if __name__ == "__main__":
    key = jax.random.PRNGKey(0)

    # LinearEncoder(input_size=32, layer_sizes=[64, 16])
    input_size = 32
    layer_sizes = [64, 16]
    dims = [input_size] + list(layer_sizes)

    weights, biases = [], []
    for i in range(len(layer_sizes)):
        key, kw, kb = jax.random.split(key, 3)
        weights.append(_kaiming_uniform(kw, dims[i], dims[i + 1]))
        biases.append(_bias_init(kb, dims[i], dims[i + 1]))

    # batch=8 exercises the single-tile path; batch=256 exercises the 2-step
    # parallel batch grid (two 128-row tiles).
    for batch in (8, 256):
        key, kx = jax.random.split(key)
        x = jax.random.normal(kx, (batch, input_size), jnp.float32)

        out = jax.block_until_ready(linear_encoder_forward(x, weights, biases))
        assert out.shape == (batch, layer_sizes[-1])

        # Tight check vs a reference using identical bf16/f32 numerics.
        ref_m = _reference_forward_matched(x, weights, biases)
        np.testing.assert_allclose(np.asarray(out), np.asarray(ref_m),
                                   rtol=1e-5, atol=1e-5)
        # Looser check vs the pure-f32 PyTorch-semantics reference
        # (bf16 MXU inputs => relaxed tolerance, as flagged in the review).
        ref_f = _reference_forward_f32(x, weights, biases)
        np.testing.assert_allclose(np.asarray(out), np.asarray(ref_f),
                                   rtol=5e-2, atol=5e-2)

    # TODO(synk): like the PyTorch module, no eps in the L2 norm -> an all-zero
    # feature row would produce NaN; add an eps if the real model needs it.
    print("KERNEL_OK")
</pallas_src>

<mosaic_0001>
module attributes {stable_mosaic.version = 11 : i64} {
  func.func @kernel(%arg0: i32, %arg1: memref<8x128xbf16, #tpu.memory_space<vmem>>, %arg2: memref<128x128xbf16, #tpu.memory_space<vmem>>, %arg3: memref<1x128xf32, #tpu.memory_space<vmem>>, %arg4: memref<128x128xbf16, #tpu.memory_space<vmem>>, %arg5: memref<1x128xf32, #tpu.memory_space<vmem>>, %arg6: memref<8x128xf32, #tpu.memory_space<vmem>>) attributes {dimension_semantics = [#tpu.dimension_semantics<parallel>], iteration_bounds = array<i64: 1>, scalar_prefetch = 0 : i64, scratch_operands = 0 : i64, tpu.core_type = #tpu.core_type<tc>, window_params = [{transform_indices = @transform_0, window_bounds = array<i64: 8, 128>}, {pipeline_mode = #tpu.pipeline_mode<synchronous>, transform_indices = @transform_1, window_bounds = array<i64: 128, 128>}, {pipeline_mode = #tpu.pipeline_mode<synchronous>, transform_indices = @transform_2, window_bounds = array<i64: 1, 128>}, {pipeline_mode = #tpu.pipeline_mode<synchronous>, transform_indices = @transform_3, window_bounds = array<i64: 128, 128>}, {pipeline_mode = #tpu.pipeline_mode<synchronous>, transform_indices = @transform_4, window_bounds = array<i64: 1, 128>}, {transform_indices = @transform_5, window_bounds = array<i64: 8, 128>}]} {
    %c0 = arith.constant 0 : index
    %c0_0 = arith.constant 0 : index
    %0 = vector.load %arg1[%c0, %c0_0] : memref<8x128xbf16, #tpu.memory_space<vmem>>, vector<8x128xbf16>
    %c0_1 = arith.constant 0 : index
    %c0_2 = arith.constant 0 : index
    %1 = vector.load %arg2[%c0_1, %c0_2] : memref<128x128xbf16, #tpu.memory_space<vmem>>, vector<128x128xbf16>
    %cst = arith.constant dense<0.000000e+00> : vector<8x128xf32>
    %2 = tpu.matmul %0, %1, %cst {dimension_numbers = #tpu.dot_dimension_numbers<[1], [0], [0], [1], [0, 0, 1, 1], [], []>} : vector<8x128xbf16>, vector<128x128xbf16>, vector<8x128xf32> -> vector<8x128xf32>
    %c0_3 = arith.constant 0 : index
    %c0_4 = arith.constant 0 : index
    %3 = vector.load %arg3[%c0_3, %c0_4] : memref<1x128xf32, #tpu.memory_space<vmem>>, vector<1x128xf32>
    %4 = vector.broadcast %3 : vector<1x128xf32> to vector<8x128xf32>
    %5 = arith.addf %2, %4 : vector<8x128xf32>
    %cst_5 = arith.constant 0.000000e+00 : f32
    %6 = vector.broadcast %cst_5 : f32 to vector<8x128xf32>
    %7 = arith.maximumf %5, %6 : vector<8x128xf32>
    %8 = arith.truncf %7 : vector<8x128xf32> to vector<8x128xbf16>
    %c0_6 = arith.constant 0 : index
    %c0_7 = arith.constant 0 : index
    %9 = vector.load %arg4[%c0_6, %c0_7] : memref<128x128xbf16, #tpu.memory_space<vmem>>, vector<128x128xbf16>
    %cst_8 = arith.constant dense<0.000000e+00> : vector<8x128xf32>
    %10 = tpu.matmul %8, %9, %cst_8 {dimension_numbers = #tpu.dot_dimension_numbers<[1], [0], [0], [1], [0, 0, 1, 1], [], []>} : vector<8x128xbf16>, vector<128x128xbf16>, vector<8x128xf32> -> vector<8x128xf32>
    %c0_9 = arith.constant 0 : index
    %c0_10 = arith.constant 0 : index
    %11 = vector.load %arg5[%c0_9, %c0_10] : memref<1x128xf32, #tpu.memory_space<vmem>>, vector<1x128xf32>
    %12 = vector.broadcast %11 : vector<1x128xf32> to vector<8x128xf32>
    %13 = arith.addf %10, %12 : vector<8x128xf32>
    %14 = arith.mulf %13, %13 : vector<8x128xf32>
    %cst_11 = arith.constant dense<0.000000e+00> : vector<8xf32>
    %15 = vector.multi_reduction <add>, %14, %cst_11 [1] : vector<8x128xf32> to vector<8xf32>
    %16 = vector.shape_cast %15 : vector<8xf32> to vector<8x1xf32>
    %17 = math.rsqrt %16 : vector<8x1xf32>
    %18 = vector.broadcast %17 : vector<8x1xf32> to vector<8x128xf32>
    %19 = arith.mulf %13, %18 : vector<8x128xf32>
    %c0_12 = arith.constant 0 : index
    %c0_13 = arith.constant 0 : index
    %20 = vector.load %arg6[%c0_12, %c0_13] : memref<8x128xf32, #tpu.memory_space<vmem>>, vector<8x128xf32>
    tpu.vector_store %arg6[%c0_12, %c0_13], %19 {strides = array<i32>} : memref<8x128xf32, #tpu.memory_space<vmem>>, vector<8x128xf32>,
    return
  }
  func.func @transform_0(%arg0: i32) -> (i32, i32) {
    %c0_i32 = arith.constant 0 : i32
    %c0_i32_0 = arith.constant 0 : i32
    return %arg0, %c0_i32 : i32, i32
  }
  func.func @transform_1(%arg0: i32) -> (i32, i32) {
    %c0_i32 = arith.constant 0 : i32
    %c0_i32_0 = arith.constant 0 : i32
    %c0_i32_1 = arith.constant 0 : i32
    return %c0_i32, %c0_i32_0 : i32, i32
  }
  func.func @transform_2(%arg0: i32) -> (i32, i32) {
    %c0_i32 = arith.constant 0 : i32
    %c0_i32_0 = arith.constant 0 : i32
    %c0_i32_1 = arith.constant 0 : i32
    return %c0_i32, %c0_i32_0 : i32, i32
  }
  func.func @transform_3(%arg0: i32) -> (i32, i32) {
    %c0_i32 = arith.constant 0 : i32
    %c0_i32_0 = arith.constant 0 : i32
    %c0_i32_1 = arith.constant 0 : i32
    return %c0_i32, %c0_i32_0 : i32, i32
  }
  func.func @transform_4(%arg0: i32) -> (i32, i32) {
    %c0_i32 = arith.constant 0 : i32
    %c0_i32_0 = arith.constant 0 : i32
    %c0_i32_1 = arith.constant 0 : i32
    return %c0_i32, %c0_i32_0 : i32, i32
  }
  func.func @transform_5(%arg0: i32) -> (i32, i32) {
    %c0_i32 = arith.constant 0 : i32
    %c0_i32_0 = arith.constant 0 : i32
    return %arg0, %c0_i32 : i32, i32
  }
}

</mosaic_0001>

<llo_original>
// kernel: tpu_custom_call.1
$region0: #{tpu_custom_call.1}
  #allocation0 [shape = 'u32[]', space=smem, size = 0x4, offset = 0x4, fixed_abs, tag = 'smem constant byte address 0x4 - core index']
  #allocation1 [shape = 'u32[144,128]{1,0:T(1,128)}', space=vmem, size = 0x12000, scoped, tag = 'internal scratch']
  %s0 = inlined_call_operand.hbm [shape: bf16[8,128], index: 0, kind: input, shape index: {}]
  %s1 = inlined_call_operand.hbm [shape: bf16[128,128], index: 1, kind: input, shape index: {}]
  %s2 = inlined_call_operand.vmem [shape: f32[1,128], index: 2, kind: input, shape index: {}]
  %s3 = inlined_call_operand.hbm [shape: bf16[128,128], index: 3, kind: input, shape index: {}]
  %s4 = inlined_call_operand.vmem [shape: f32[1,128], index: 4, kind: input, shape index: {}]
  %s5 = inlined_call_operand.hbm [shape: f32[8,128], index: 5, kind: output, shape index: {}]
  %s6 = sld [smem:[#allocation0]]
  $region42: #{tpu_custom_call.1} parent=0
    _
  %s8 = ssub.s32 1, %s6
  %s9 = scalar_select 0, %s8, %s6
  $region1: #{tpu_custom_call.1} parent=0
    #allocation2 [shape = 'u8[2048]{0}', space=vmem, size = 0x800, scoped, tag = 'input window, operand 0, single buffered']
    #allocation3 [shape = 's32[1]{0}', space=sflag, size = 0x4, scoped, tag = 'scoped memory for tpu_custom_call.1']
    #allocation4 [shape = 's32[1]{0}', space=sflag, size = 0x4, scoped, tag = 'scoped memory for tpu_custom_call.1']
    #allocation5 [shape = 'u8[32768]{0}', space=vmem, size = 0x8000, scoped, tag = 'input window, operand 1, single buffered']
    #allocation6 [shape = 's32[1]{0}', space=sflag, size = 0x4, scoped, tag = 'scoped memory for tpu_custom_call.1']
    #allocation7 [shape = 'u8[32768]{0}', space=vmem, size = 0x8000, scoped, tag = 'input window, operand 3, single buffered']
    #allocation8 [shape = 'u8[4096]{0}', space=vmem, size = 0x1000, scoped, tag = 'output window, operand 0, single buffered']
    %10 = vsyncpa [#allocation3], 0
    %11 = vsyncpa [#allocation6], 0
    %12 = vsyncpa [#allocation4], 0
    // Predicated region
    $region2: #{tpu_custom_call.1} parent=1 // pred_check
      _
    $region3: #{tpu_custom_call.1} parent=1 // pred_check_branch
      %14 = sbr.rel (0) target = $region5
    $region4: #{tpu_custom_call.1} parent=1 // pred_region
      %s16 = ssub.s32 64, 64
      %17 = vsyncadd [#allocation3], %s16
      %s19 = sshll.u32 [#allocation2], 4
      %s20 = int_to_ptr.vmem [resolvable:$true] %s19
      %22 = dma.hbm_to_vmem [thread:$0]  %s0, 64, %s20, [#allocation3]
    $region5: #{tpu_custom_call.1} parent=1 // pred_fallthru
      _
    // Predicated region
    $region6: #{tpu_custom_call.1} parent=1 // pred_check
      _
    $region7: #{tpu_custom_call.1} parent=1 // pred_check_branch
      %24 = sbr.rel (0) target = $region9
    $region8: #{tpu_custom_call.1} parent=1 // pred_region
      %s26 = ssub.s32 1024, 1024
      %27 = vsyncadd [#allocation6], %s26
      %s28 = sshll.u32 [#allocation5], 4
      %s29 = int_to_ptr.vmem [resolvable:$true] %s28
      %34 = dma.hbm_to_vmem [thread:$0]  %s1, 1024, %s29, [#allocation6], 64, 64, 4
    $region9: #{tpu_custom_call.1} parent=1 // pred_fallthru
      _
    // Predicated region
    $region10: #{tpu_custom_call.1} parent=1 // pred_check
      _
    $region11: #{tpu_custom_call.1} parent=1 // pred_check_branch
      %36 = sbr.rel (0) target = $region13
    $region12: #{tpu_custom_call.1} parent=1 // pred_region
      _
    $region13: #{tpu_custom_call.1} parent=1 // pred_fallthru
      _
    // Predicated region
    $region14: #{tpu_custom_call.1} parent=1 // pred_check
      _
    $region15: #{tpu_custom_call.1} parent=1 // pred_check_branch
      %38 = sbr.rel (0) target = $region17
    $region16: #{tpu_custom_call.1} parent=1 // pred_region
      %s40 = ssub.s32 1024, 1024
      %41 = vsyncadd [#allocation6], %s40
      %s42 = sshll.u32 [#allocation7], 4
      %s43 = int_to_ptr.vmem [resolvable:$true] %s42
      %48 = dma.hbm_to_vmem [thread:$0]  %s3, 1024, %s43, [#allocation6], 64, 64, 4
    $region17: #{tpu_custom_call.1} parent=1 // pred_fallthru
      _
    // Predicated region
    $region18: #{tpu_custom_call.1} parent=1 // pred_check
      _
    $region19: #{tpu_custom_call.1} parent=1 // pred_check_branch
      %50 = sbr.rel (0) target = $region21
    $region20: #{tpu_custom_call.1} parent=1 // pred_region
      _
    $region21: #{tpu_custom_call.1} parent=1 // pred_fallthru
      _
    // Predicated region
    $region22: #{tpu_custom_call.1} parent=1 // pred_check
      _
    $region23: #{tpu_custom_call.1} parent=1 // pred_check_branch
      %52 = sbr.rel (0) target = $region25
    $region24: #{tpu_custom_call.1} parent=1 // pred_region
      %53 = dma.done [#allocation3], 64
    $region25: #{tpu_custom_call.1} parent=1 // pred_fallthru
      _
    // Predicated region
    $region26: #{tpu_custom_call.1} parent=1 // pred_check
      _
    $region27: #{tpu_custom_call.1} parent=1 // pred_check_branch
      %55 = sbr.rel (0) target = $region29
    $region28: #{tpu_custom_call.1} parent=1 // pred_region
      %56 = dma.done [#allocation6], 1024
    $region29: #{tpu_custom_call.1} parent=1 // pred_fallthru
      _
    // Predicated region
    $region30: #{tpu_custom_call.1} parent=1 // pred_check
      _
    $region31: #{tpu_custom_call.1} parent=1 // pred_check_branch
      %58 = sbr.rel (0) target = $region33
    $region32: #{tpu_custom_call.1} parent=1 // pred_region
      %59 = dma.done [#allocation6], 1024
    $region33: #{tpu_custom_call.1} parent=1 // pred_fallthru
      _
    %v61 = vld [vmem:[#allocation2] sm:$0xf]
    %v62 = vld [vmem:[#allocation5] sm:$0xf]
    %v63 = vld [vmem:[#allocation5 + $0x4] sm:$0xf]
    %v64 = vld [vmem:[#allocation5 + $0x8] sm:$0xf]
    %v65 = vld [vmem:[#allocation5 + $0xc] sm:$0xf]
    %v66 = vld [vmem:[#allocation5 + $0x10] sm:$0xf]
    %v67 = vld [vmem:[#allocation5 + $0x14] sm:$0xf]
    %v68 = vld [vmem:[#allocation5 + $0x18] sm:$0xf]
    %v69 = vld [vmem:[#allocation5 + $0x1c] sm:$0xf]
    %v70 = vld [vmem:[#allocation5 + $0x20] sm:$0xf]
    %v71 = vld [vmem:[#allocation5 + $0x24] sm:$0xf]
    %v72 = vld [vmem:[#allocation5 + $0x28] sm:$0xf]
    %v73 = vld [vmem:[#allocation5 + $0x2c] sm:$0xf]
    %v74 = vld [vmem:[#allocation5 + $0x30] sm:$0xf]
    %v75 = vld [vmem:[#allocation5 + $0x34] sm:$0xf]
    %v76 = vld [vmem:[#allocation5 + $0x38] sm:$0xf]
    %v77 = vld [vmem:[#allocation5 + $0x3c] sm:$0xf]
    %v78 = vld [vmem:[%s2] sm:$0x1]
    %v80 = vlaneseq
    %v81 = vshrl.u32 %v80, 7
    %v82 = vsub.s32 0, %v81
    %v83 = vrot.slane %v78, %v82
    %v101 = vunpack.c.l.b16 %v62
    %v102 = vunpack.c.l.b16 %v63
    %v103 = vunpack.c.l.b16 %v64
    %v104 = vunpack.c.l.b16 %v65
    %v105 = vunpack.c.l.b16 %v66
    %v106 = vunpack.c.l.b16 %v67
    %v107 = vunpack.c.l.b16 %v68
    %v108 = vunpack.c.l.b16 %v69
    %v109 = vunpack.c.l.b16 %v70
    %v110 = vunpack.c.l.b16 %v71
    %v111 = vunpack.c.l.b16 %v72
    %v112 = vunpack.c.l.b16 %v73
    %v113 = vunpack.c.l.b16 %v74
    %v114 = vunpack.c.l.b16 %v75
    %v115 = vunpack.c.l.b16 %v76
    %v116 = vunpack.c.l.b16 %v77
    %v117 = vpack.c.b16 %v102, %v101
    %v118 = vpack.c.b16 %v104, %v103
    %v119 = vpack.c.b16 %v106, %v105
    %v120 = vpack.c.b16 %v108, %v107
    %v121 = vpack.c.b16 %v110, %v109
    %v122 = vpack.c.b16 %v112, %v111
    %v123 = vpack.c.b16 %v114, %v113
    %v124 = vpack.c.b16 %v116, %v115
    %133 = vmatprep.subr.bf16.mxu0 0
    %134 = vmatpush1.bf16.msra.mxu0 %v124
    %135 = vmatprep.subr.bf16.mxu0 0
    %136 = vmatpush1.bf16.msra.mxu0 %v123
    %137 = vmatprep.subr.bf16.mxu0 0
    %138 = vmatpush1.bf16.msra.mxu0 %v122
    %139 = vmatprep.subr.bf16.mxu0 0
    %140 = vmatpush1.bf16.msra.mxu0 %v121
    %141 = vmatprep.subr.bf16.mxu0 0
    %142 = vmatpush1.bf16.msra.mxu0 %v120
    %143 = vmatprep.subr.bf16.mxu0 0
    %144 = vmatpush1.bf16.msra.mxu0 %v119
    %145 = vmatprep.subr.bf16.mxu0 0
    %146 = vmatpush1.bf16.msra.mxu0 %v118
    %147 = vmatprep.subr.bf16.mxu0 0
    %148 = vmatpush1.bf16.msra.mxu0 %v117
    %149 = vmatprep.subr.bf16.mxu0 0
    %150 = vmatpush2.bf16.msra.mxu0 0
    %151 = vmatprep.subr.bf16.mxu0 0
    %152 = vmatpush2.bf16.msra.mxu0 0
    %153 = vmatprep.subr.bf16.mxu0 0
    %154 = vmatpush2.bf16.msra.mxu0 0
    %155 = vmatprep.subr.bf16.mxu0 0
    %156 = vmatpush2.bf16.msra.mxu0 0
    %157 = vmatprep.subr.bf16.mxu0 0
    %158 = vmatpush2.bf16.msra.mxu0 0
    %159 = vmatprep.subr.bf16.mxu0 0
    %160 = vmatpush2.bf16.msra.mxu0 0
    %161 = vmatprep.subr.bf16.mxu0 0
    %162 = vmatpush2.bf16.msra.mxu0 0
    %163 = vmatprep.subr.bf16.mxu0 0
    %164 = vmatpush2.bf16.msra.mxu0 0
    %165 = vmatprep.mubr.bf16.mxu0 0
    %166 = vmatmul.mubr.bf16.gmra.mxu0 %v61
    %v167 = vpop.f32.mrf.mxu0
    %v168 = vadd.f32 %v83, %v167
    %v169 = vpop.f32.mrf.mxu0
    %v170 = vpop.f32.mrf.mxu0
    %v171 = vpop.f32.mrf.mxu0
    %172 = vdwg.mxu0
    %v173 = vmax.f32 %v168, 0.0
    %v174 = vpack.c.bf16 %v173, %v173
    %v175 = vld [vmem:[#allocation7] sm:$0xf]
    %v176 = vld [vmem:[#allocation7 + $0x4] sm:$0xf]
    %v177 = vld [vmem:[#allocation7 + $0x8] sm:$0xf]
    %v178 = vld [vmem:[#allocation7 + $0xc] sm:$0xf]
    %v179 = vld [vmem:[#allocation7 + $0x10] sm:$0xf]
    %v180 = vld [vmem:[#allocation7 + $0x14] sm:$0xf]
    %v181 = vld [vmem:[#allocation7 + $0x18] sm:$0xf]
    %v182 = vld [vmem:[#allocation7 + $0x1c] sm:$0xf]
    %v183 = vld [vmem:[#allocation7 + $0x20] sm:$0xf]
    %v184 = vld [vmem:[#allocation7 + $0x24] sm:$0xf]
    %v185 = vld [vmem:[#allocation7 + $0x28] sm:$0xf]
    %v186 = vld [vmem:[#allocation7 + $0x2c] sm:$0xf]
    %v187 = vld [vmem:[#allocation7 + $0x30] sm:$0xf]
    %v188 = vld [vmem:[#allocation7 + $0x34] sm:$0xf]
    %v189 = vld [vmem:[#allocation7 + $0x38] sm:$0xf]
    %v190 = vld [vmem:[#allocation7 + $0x3c] sm:$0xf]
    %v191 = vld [vmem:[%s4] sm:$0x1]
    %v193 = vlaneseq
    %v194 = vshrl.u32 %v193, 7
    %v195 = vsub.s32 0, %v194
    %v196 = vrot.slane %v191, %v195
    %v214 = vunpack.c.l.b16 %v175
    %v215 = vunpack.c.l.b16 %v176
    %v216 = vunpack.c.l.b16 %v177
    %v217 = vunpack.c.l.b16 %v178
    %v218 = vunpack.c.l.b16 %v179
    %v219 = vunpack.c.l.b16 %v180
    %v220 = vunpack.c.l.b16 %v181
    %v221 = vunpack.c.l.b16 %v182
    %v222 = vunpack.c.l.b16 %v183
    %v223 = vunpack.c.l.b16 %v184
    %v224 = vunpack.c.l.b16 %v185
    %v225 = vunpack.c.l.b16 %v186
    %v226 = vunpack.c.l.b16 %v187
    %v227 = vunpack.c.l.b16 %v188
    %v228 = vunpack.c.l.b16 %v189
    %v229 = vunpack.c.l.b16 %v190
    %v230 = vpack.c.b16 %v215, %v214
    %v231 = vpack.c.b16 %v217, %v216
    %v232 = vpack.c.b16 %v219, %v218
    %v233 = vpack.c.b16 %v221, %v220
    %v234 = vpack.c.b16 %v223, %v222
    %v235 = vpack.c.b16 %v225, %v224
    %v236 = vpack.c.b16 %v227, %v226
    %v237 = vpack.c.b16 %v229, %v228
    %246 = vmatprep.subr.bf16.mxu0 0
    %247 = vmatpush1.bf16.msra.mxu0 %v237
    %248 = vmatprep.subr.bf16.mxu0 0
    %249 = vmatpush1.bf16.msra.mxu0 %v236
    %250 = vmatprep.subr.bf16.mxu0 0
    %251 = vmatpush1.bf16.msra.mxu0 %v235
    %252 = vmatprep.subr.bf16.mxu0 0
    %253 = vmatpush1.bf16.msra.mxu0 %v234
    %254 = vmatprep.subr.bf16.mxu0 0
    %255 = vmatpush1.bf16.msra.mxu0 %v233
    %256 = vmatprep.subr.bf16.mxu0 0
    %257 = vmatpush1.bf16.msra.mxu0 %v232
    %258 = vmatprep.subr.bf16.mxu0 0
    %259 = vmatpush1.bf16.msra.mxu0 %v231
    %260 = vmatprep.subr.bf16.mxu0 0
    %261 = vmatpush1.bf16.msra.mxu0 %v230
    %262 = vmatprep.subr.bf16.mxu0 0
    %263 = vmatpush2.bf16.msra.mxu0 0
    %264 = vmatprep.subr.bf16.mxu0 0
    %265 = vmatpush2.bf16.msra.mxu0 0
    %266 = vmatprep.subr.bf16.mxu0 0
    %267 = vmatpush2.bf16.msra.mxu0 0
    %268 = vmatprep.subr.bf16.mxu0 0
    %269 = vmatpush2.bf16.msra.mxu0 0
    %270 = vmatprep.subr.bf16.mxu0 0
    %271 = vmatpush2.bf16.msra.mxu0 0
    %272 = vmatprep.subr.bf16.mxu0 0
    %273 = vmatpush2.bf16.msra.mxu0 0
    %274 = vmatprep.subr.bf16.mxu0 0
    %275 = vmatpush2.bf16.msra.mxu0 0
    %276 = vmatprep.subr.bf16.mxu0 0
    %277 = vmatpush2.bf16.msra.mxu0 0
    %278 = vmatprep.mubr.bf16.mxu0 0
    %279 = vmatmul.mubr.bf16.gmra.mxu0 %v174
    %v280 = vpop.f32.mrf.mxu0
    %v281 = vadd.f32 %v196, %v280
    %v282 = vpop.f32.mrf.mxu0
    %v283 = vpop.f32.mrf.mxu0
    %v284 = vpop.f32.mrf.mxu0
    %285 = vdwg.mxu0
    %v286 = vmul.f32 %v281, %v281
    %287 = vadd.xlane.f32.xlu0 %v286
    %v288 = vpop.xlane.xlu0 %287
    %v289 = vrsqrt.pop %v288
    %v290 = vmul.f32 %v281, %v289
    %291 = vst [vmem:[#allocation8] sm:$0xff] %v290
    // Predicated region
    $region34: #{tpu_custom_call.1} parent=1 // pred_check
      _
    $region35: #{tpu_custom_call.1} parent=1 // pred_check_branch
      %293 = sbr.rel (0) target = $region37
    $region36: #{tpu_custom_call.1} parent=1 // pred_region
      %s295 = ssub.s32 128, 128
      %296 = vsyncadd [#allocation4], %s295
      %s298 = sshll.u32 [#allocation8], 4
      %s299 = int_to_ptr.vmem [resolvable:$true] %s298
      %301 = dma.vmem_to_hbm [thread:$0]  %s299, 128, %s5, [#allocation4]
    $region37: #{tpu_custom_call.1} parent=1 // pred_fallthru
      _
    // Predicated region
    $region38: #{tpu_custom_call.1} parent=1 // pred_check
      _
    $region39: #{tpu_custom_call.1} parent=1 // pred_check_branch
      %303 = sbr.rel (0) target = $region41
    $region40: #{tpu_custom_call.1} parent=1 // pred_region
      %304 = dma.done [#allocation4], 128
    $region41: #{tpu_custom_call.1} parent=1 // pred_fallthru
      _
    %305 = vsyncpa [#allocation3], 1
    %306 = vsyncpa [#allocation6], 1
    %307 = vsyncpa [#allocation4], 1

</llo_original>
